<compile_context>
chip_gen: v7x
topology: tpu7x:2x2x1
jax: 0.10.0
libtpu: 0.0.40
codegen_flags: <defaults>
</compile_context>

<pallas_src>
import functools

import jax
import jax.numpy as jnp
from jax import lax
from jax.experimental import pallas as pl
from jax.experimental.pallas import tpu as pltpu


def _round_up(x, m):
    return (x + m - 1) // m * m


# ----------------------------------------------------------------------------
# Tiled dense (x @ w + b) kernel with K-loop accumulation (in_proj / out_proj).
# ----------------------------------------------------------------------------
def _dense_kernel(x_ref, w_ref, b_ref, o_ref, acc_ref):
    k = pl.program_id(2)

    @pl.when(k == 0)
    def _():
        acc_ref[...] = jnp.zeros_like(acc_ref)

    acc_ref[...] += jnp.dot(x_ref[...], w_ref[...],
                            preferred_element_type=jnp.float32)

    @pl.when(k == pl.num_programs(2) - 1)
    def _():
        o_ref[...] = (acc_ref[...] + b_ref[...]).astype(o_ref.dtype)


def dense_bias(x, w, b, *, out_dtype=jnp.float32, tm=256, tn=256, tk=512):
    """x: (M, K), w: (K, N), b: (N,) -> (M, N) in out_dtype (bf16 MXU, f32 accum)."""
    M, K = x.shape
    Kw, N = w.shape
    assert Kw == K and b.shape == (N,)

    tm = min(tm, _round_up(M, 16))
    tn = min(tn, _round_up(N, 128))
    tk = min(tk, _round_up(K, 128))
    Mp, Kp, Np = _round_up(M, tm), _round_up(K, tk), _round_up(N, tn)

    # Pre-cast matmul operands to bf16 once so per-grid-step block refetches
    # (weights are refetched Mp//tm times) move half the HBM bytes.
    xp = jnp.pad(x, ((0, Mp - M), (0, Kp - K))).astype(jnp.bfloat16)
    wp = jnp.pad(w, ((0, Kp - K), (0, Np - N))).astype(jnp.bfloat16)
    bp = jnp.pad(b, (0, Np - N)).reshape(1, Np).astype(jnp.float32)

    out = pl.pallas_call(
        _dense_kernel,
        out_shape=jax.ShapeDtypeStruct((Mp, Np), out_dtype),
        grid=(Mp // tm, Np // tn, Kp // tk),
        in_specs=[
            pl.BlockSpec((tm, tk), lambda i, j, k: (i, k)),
            pl.BlockSpec((tk, tn), lambda i, j, k: (k, j)),
            pl.BlockSpec((1, tn), lambda i, j, k: (0, j)),
        ],
        out_specs=pl.BlockSpec((tm, tn), lambda i, j, k: (i, j)),
        scratch_shapes=[pltpu.VMEM((tm, tn), jnp.float32)],
        compiler_params=pltpu.CompilerParams(
            dimension_semantics=("parallel", "parallel", "arbitrary"),
            vmem_limit_bytes=32 * 1024 * 1024,
        ),
        cost_estimate=pl.CostEstimate(
            flops=int(2 * Mp * Kp * Np),
            transcendentals=0,
            bytes_accessed=int(2 * (Mp * Kp + Kp * Np + Mp * Np)),
        ),
    )(xp, wp, bp)
    return out[:M, :N]


# ----------------------------------------------------------------------------
# Banded (windowed) attention core kernel: one (batch, query-block) per program,
# all heads packed along the lane (E) dimension.  The previous K/V block is
# carried across grid steps in VMEM scratch (no re-fetch from HBM).
# ----------------------------------------------------------------------------
def _banded_attn_kernel(*refs, num_heads, window, seq_len, tq, forward_only):
    if forward_only:
        q_ref, k_ref, v_ref, o_ref, kprev_ref, vprev_ref = refs
        kn_ref = vn_ref = None
    else:
        q_ref, k_ref, v_ref, kn_ref, vn_ref, o_ref, kprev_ref, vprev_ref = refs

    i = pl.program_id(1)
    r = window // 2
    E = q_ref.shape[-1]
    Dh = E // num_heads
    nkv = 2 if forward_only else 3
    TK = nkv * tq

    # Zero the carried previous-block scratch at the start of every batch row.
    # Its (masked-out) contents otherwise come from a different batch or are
    # uninitialized bits -- NaN/Inf there would leak via 0 * NaN in p @ v.
    @pl.when(i == 0)
    def _():
        kprev_ref[...] = jnp.zeros_like(kprev_ref)
        vprev_ref[...] = jnp.zeros_like(vprev_ref)

    q = q_ref[0]                                                  # (TQ, E) bf16, scale pre-folded
    k_cur = k_ref[0]                                              # (TQ, E) bf16
    v_cur = v_ref[0]
    k_parts = [kprev_ref[...], k_cur]
    v_parts = [vprev_ref[...], v_cur]
    if not forward_only:
        k_parts.append(kn_ref[0])
        v_parts.append(vn_ref[0])
    k = jnp.concatenate(k_parts, axis=0)                          # (TK, E)
    v = jnp.concatenate(v_parts, axis=0)                          # (TK, E)

    # Band mask in absolute positions.  Key labels start at the *previous* block;
    # (k_pos >= 0) / (k_pos < seq_len) also invalidate the zeroed/aliased data at
    # the sequence edges and any zero-padded rows beyond the true sequence length.
    q_pos = i * tq + lax.broadcasted_iota(jnp.int32, (tq, TK), 0)
    k_pos = (i - 1) * tq + lax.broadcasted_iota(jnp.int32, (tq, TK), 1)
    allow = (k_pos >= 0) & (k_pos < seq_len) & (k_pos >= q_pos - r)
    if forward_only:
        allow = allow & (k_pos <= q_pos)
    else:
        allow = allow & (k_pos <= q_pos + r)
    neg = jnp.float32(-1e30)

    outs = []
    for h in range(num_heads):
        sl = slice(h * Dh, (h + 1) * Dh)
        qh, kh, vh = q[:, sl], k[:, sl], v[:, sl]
        s = jnp.einsum("qd,kd->qk", qh, kh, preferred_element_type=jnp.float32)
        s = jnp.where(allow, s, neg)
        m = jnp.max(s, axis=-1, keepdims=True)
        p = jnp.exp(s - m)
        l = jnp.sum(p, axis=-1, keepdims=True)
        oh = jnp.dot(p.astype(vh.dtype), vh, preferred_element_type=jnp.float32)
        outs.append(oh * pl.reciprocal(l, approx=True))           # deferred normalization
    o_ref[0] = jnp.concatenate(outs, axis=-1).astype(o_ref.dtype)

    # Carry the current K/V block so the next grid step doesn't re-fetch it.
    kprev_ref[...] = k_cur
    vprev_ref[...] = v_cur


def banded_attention(q2, k2, v2, *, window, num_heads, forward_only):
    """q2/k2/v2: (N, L, E) bf16 (query already scaled by 1/sqrt(Dh)) -> (N, L, E) bf16."""
    N, L, E = q2.shape
    r = window // 2
    TQ = max(min(128, _round_up(L, 16)), _round_up(max(r, 1), 16))
    assert TQ >= r, "query block must cover the half-window"
    Lp = _round_up(L, TQ)
    pad = ((0, 0), (0, Lp - L), (0, 0))
    q2p, k2p, v2p = jnp.pad(q2, pad), jnp.pad(k2, pad), jnp.pad(v2, pad)

    nblk = Lp // TQ
    nkv = 2 if forward_only else 3
    TK = nkv * TQ

    blk = (1, TQ, E)
    idx_cur = lambda n, i: (n, i, 0)
    idx_next = lambda n, i: (n, jnp.minimum(i + 1, nblk - 1), 0)

    in_specs = [pl.BlockSpec(blk, idx_cur),          # q
                pl.BlockSpec(blk, idx_cur),          # k (current block)
                pl.BlockSpec(blk, idx_cur)]          # v (current block)
    operands = [q2p, k2p, v2p]
    if not forward_only:
        in_specs += [pl.BlockSpec(blk, idx_next),    # k (next block)
                     pl.BlockSpec(blk, idx_next)]    # v (next block)
        operands += [k2p, v2p]

    kernel = functools.partial(
        _banded_attn_kernel, num_heads=num_heads, window=window, seq_len=L,
        tq=TQ, forward_only=forward_only,
    )
    out = pl.pallas_call(
        kernel,
        out_shape=jax.ShapeDtypeStruct((N, Lp, E), jnp.bfloat16),
        grid=(N, nblk),
        in_specs=in_specs,
        out_specs=pl.BlockSpec(blk, idx_cur),
        scratch_shapes=[pltpu.VMEM((TQ, E), jnp.bfloat16),   # carried k_prev
                        pltpu.VMEM((TQ, E), jnp.bfloat16)],  # carried v_prev
        compiler_params=pltpu.CompilerParams(
            dimension_semantics=("parallel", "arbitrary"),
            vmem_limit_bytes=32 * 1024 * 1024,
        ),
        cost_estimate=pl.CostEstimate(
            flops=int(4 * N * Lp * TK * E),
            transcendentals=int(N * Lp * TK * num_heads),
            bytes_accessed=int(2 * N * Lp * E * (2 + nkv)),
        ),
    )(*operands)
    return out[:, :L, :]


# ----------------------------------------------------------------------------
# ConvolvedAttention forward (glue around the kernels).
# ----------------------------------------------------------------------------
def init_params(key, embed_dim):
    """Deterministic synthetic weights matching CustomMultiheadAttention shapes."""
    k1, k2, k3, k4 = jax.random.split(key, 4)
    s = 1.0 / float(embed_dim) ** 0.5
    return dict(
        in_proj_weight=jax.random.normal(k1, (3 * embed_dim, embed_dim), jnp.float32) * s,
        in_proj_bias=jax.random.normal(k2, (3 * embed_dim,), jnp.float32) * 0.01,
        out_proj_weight=jax.random.normal(k3, (embed_dim, embed_dim), jnp.float32) * s,
        out_proj_bias=jax.random.normal(k4, (embed_dim,), jnp.float32) * 0.01,
    )


def convolved_attention_forward(params, query, key, value, *, window, num_heads,
                                forward_only=True):
    """query/key/value: (L, N, E).  Returns attention output of shape (L, N, E)."""
    L, N, E = query.shape
    H = num_heads
    Dh = E // H
    assert E % H == 0 and window % 2 == 1

    Wq, Wk, Wv = jnp.split(params["in_proj_weight"], 3, axis=0)   # each (E, E)
    bq, bk, bv = jnp.split(params["in_proj_bias"], 3, axis=0)     # each (E,)
    scale = 1.0 / float(Dh) ** 0.5
    Wq = Wq * scale                                               # fold 1/sqrt(Dh) into q proj
    bq = bq * scale

    def flat(x):                                                  # (L,N,E) -> (N*L, E)
        return x.transpose(1, 0, 2).reshape(N * L, E)

    if (query is key) and (key is value):
        # fused Q/K/V projection: single matmul against the concatenated (E, 3E) weight
        W = jnp.concatenate([Wq, Wk, Wv], axis=0).T               # (E, 3E)
        b = jnp.concatenate([bq, bk, bv], axis=0)                 # (3E,)
        qkv = dense_bias(flat(query), W, b, out_dtype=jnp.bfloat16)
        q2, k2, v2 = qkv[:, :E], qkv[:, E:2 * E], qkv[:, 2 * E:]
    else:
        q2 = dense_bias(flat(query), Wq.T, bq, out_dtype=jnp.bfloat16)
        k2 = dense_bias(flat(key), Wk.T, bk, out_dtype=jnp.bfloat16)
        v2 = dense_bias(flat(value), Wv.T, bv, out_dtype=jnp.bfloat16)

    shape3 = (N, L, E)
    oh = banded_attention(q2.reshape(shape3), k2.reshape(shape3), v2.reshape(shape3),
                          window=window, num_heads=H, forward_only=forward_only)

    out = dense_bias(oh.reshape(N * L, E), params["out_proj_weight"].T,
                     params["out_proj_bias"], out_dtype=jnp.float32)
    return out.reshape(N, L, E).transpose(1, 0, 2)                # (L, N, E)


# ----------------------------------------------------------------------------
# Pure-JAX f32 reference (mirrors PyTorch multi_head_attention_forward + masking).
# ----------------------------------------------------------------------------
def reference_forward(params, query, key, value, *, window, num_heads,
                      forward_only=True):
    L, N, E = query.shape
    H = num_heads
    Dh = E // H
    Wq, Wk, Wv = jnp.split(params["in_proj_weight"], 3, axis=0)
    bq, bk, bv = jnp.split(params["in_proj_bias"], 3, axis=0)

    def proj(x, W, b):
        return x.reshape(L * N, E) @ W.T + b

    def to_heads(x):
        return x.reshape(L, N, H, Dh).transpose(1, 2, 0, 3)       # (N, H, L, Dh)

    q = to_heads(proj(query, Wq, bq))
    k = to_heads(proj(key, Wk, bk))
    v = to_heads(proj(value, Wv, bv))

    scale = 1.0 / float(Dh) ** 0.5
    s = jnp.einsum("nhld,nhmd->nhlm", q, k) * scale               # (N,H,L,L)

    target = jnp.arange(L)[:, None]
    source = jnp.arange(L)[None, :]
    allow = jnp.abs(source - target) <= window // 2
    if forward_only:
        allow = allow & (target >= source)
    s = jnp.where(allow[None, None], s, jnp.float32(-1e30))

    m = jnp.max(s, axis=-1, keepdims=True)
    p = jnp.exp(s - m)
    p = p / jnp.sum(p, axis=-1, keepdims=True)
    o = jnp.einsum("nhlm,nhmd->nhld", p, v)                       # (N,H,L,Dh)
    o = o.transpose(2, 0, 1, 3).reshape(L * N, E)
    out = o @ params["out_proj_weight"].T + params["out_proj_bias"]
    return out.reshape(L, N, E)


if __name__ == "__main__":
    # small shapes consistent with the module: (L, N, E) seq-first inputs
    L, N, E, H, WINDOW = 16, 2, 32, 4, 5

    root = jax.random.PRNGKey(0)
    kp, kx, kk, kv = jax.random.split(root, 4)
    params = init_params(kp, E)
    x = jax.random.normal(kx, (L, N, E), jnp.float32)

    # self-attention (fused QKV projection path, forward_only=True default)
    out = convolved_attention_forward(params, x, x, x, window=WINDOW, num_heads=H,
                                      forward_only=True)
    out = jax.block_until_ready(out)
    ref = reference_forward(params, x, x, x, window=WINDOW, num_heads=H,
                            forward_only=True)
    assert out.shape == (L, N, E)
    err = float(jnp.max(jnp.abs(out - ref)))
    # bf16 MXU inputs (f32 accumulation) -> compare against the f32 reference at bf16-level tol
    assert jnp.allclose(out, ref, atol=5e-2, rtol=5e-2), f"self-attn mismatch, max abs err {err}"

    # distinct q/k/v (separate projection path)
    key_t = jax.random.normal(kk, (L, N, E), jnp.float32)
    val_t = jax.random.normal(kv, (L, N, E), jnp.float32)
    out2 = jax.block_until_ready(
        convolved_attention_forward(params, x, key_t, val_t, window=WINDOW,
                                    num_heads=H, forward_only=True))
    ref2 = reference_forward(params, x, key_t, val_t, window=WINDOW, num_heads=H,
                             forward_only=True)
    err2 = float(jnp.max(jnp.abs(out2 - ref2)))
    assert jnp.allclose(out2, ref2, atol=5e-2, rtol=5e-2), f"cross-attn mismatch, max abs err {err2}"

    # symmetric (non-causal) window path (exercises the 'next' K/V block branch)
    out3 = jax.block_until_ready(
        convolved_attention_forward(params, x, x, x, window=WINDOW, num_heads=H,
                                    forward_only=False))
    ref3 = reference_forward(params, x, x, x, window=WINDOW, num_heads=H,
                             forward_only=False)
    err3 = float(jnp.max(jnp.abs(out3 - ref3)))
    assert jnp.allclose(out3, ref3, atol=5e-2, rtol=5e-2), f"two-sided mismatch, max abs err {err3}"

    print("KERNEL_OK")
</pallas_src>

<mosaic_0001>
module attributes {stable_mosaic.version = 11 : i64} {
  func.func @_dense_kernel(%arg0: i32, %arg1: i32, %arg2: i32, %arg3: memref<32x128xbf16, #tpu.memory_space<vmem>>, %arg4: memref<128x128xbf16, #tpu.memory_space<vmem>>, %arg5: memref<1x128xf32, #tpu.memory_space<vmem>>, %arg6: memref<32x128xbf16, #tpu.memory_space<vmem>>, %arg7: memref<32x128xf32, #tpu.memory_space<vmem>>) attributes {dimension_semantics = [#tpu.dimension_semantics<parallel>, #tpu.dimension_semantics<parallel>, #tpu.dimension_semantics<arbitrary>], iteration_bounds = array<i64: 1, 1, 1>, scalar_prefetch = 0 : i64, scratch_operands = 1 : i64, tpu.core_type = #tpu.core_type<tc>, window_params = [{transform_indices = @transform_0, window_bounds = array<i64: 32, 128>}, {transform_indices = @transform_1, window_bounds = array<i64: 128, 128>}, {transform_indices = @transform_2, window_bounds = array<i64: 1, 128>}, {transform_indices = @transform_3, window_bounds = array<i64: 32, 128>}]} {
    %c0_i32 = arith.constant 0 : i32
    %0 = arith.cmpi eq, %arg2, %c0_i32 : i32
    %1 = arith.extui %0 : i1 to i32
    %c0_i32_0 = arith.constant 0 : i32
    %2 = arith.cmpi ne, %1, %c0_i32_0 : i32
    scf.if %2 {
      %cst_10 = arith.constant 0.000000e+00 : f32
      %12 = vector.broadcast %cst_10 : f32 to vector<32x128xf32>
      %c0_11 = arith.constant 0 : index
      %c0_12 = arith.constant 0 : index
      %13 = vector.load %arg7[%c0_11, %c0_12] : memref<32x128xf32, #tpu.memory_space<vmem>>, vector<32x128xf32>
      tpu.vector_store %arg7[%c0_11, %c0_12], %12 {strides = array<i32>} : memref<32x128xf32, #tpu.memory_space<vmem>>, vector<32x128xf32>,
    } else {
    }
    %c0 = arith.constant 0 : index
    %c0_1 = arith.constant 0 : index
    %3 = vector.load %arg7[%c0, %c0_1] : memref<32x128xf32, #tpu.memory_space<vmem>>, vector<32x128xf32>
    %c0_2 = arith.constant 0 : index
    %c0_3 = arith.constant 0 : index
    %4 = vector.load %arg3[%c0_2, %c0_3] : memref<32x128xbf16, #tpu.memory_space<vmem>>, vector<32x128xbf16>
    %c0_4 = arith.constant 0 : index
    %c0_5 = arith.constant 0 : index
    %5 = vector.load %arg4[%c0_4, %c0_5] : memref<128x128xbf16, #tpu.memory_space<vmem>>, vector<128x128xbf16>
    %cst = arith.constant dense<0.000000e+00> : vector<32x128xf32>
    %6 = tpu.matmul %4, %5, %cst {dimension_numbers = #tpu.dot_dimension_numbers<[1], [0], [0], [1], [0, 0, 1, 1], [], []>} : vector<32x128xbf16>, vector<128x128xbf16>, vector<32x128xf32> -> vector<32x128xf32>
    %7 = arith.addf %3, %6 : vector<32x128xf32>
    %c0_6 = arith.constant 0 : index
    %c0_7 = arith.constant 0 : index
    %8 = vector.load %arg7[%c0_6, %c0_7] : memref<32x128xf32, #tpu.memory_space<vmem>>, vector<32x128xf32>
    tpu.vector_store %arg7[%c0_6, %c0_7], %7 {strides = array<i32>} : memref<32x128xf32, #tpu.memory_space<vmem>>, vector<32x128xf32>,
    %c0_i32_8 = arith.constant 0 : i32
    %9 = arith.cmpi eq, %arg2, %c0_i32_8 : i32
    %10 = arith.extui %9 : i1 to i32
    %c0_i32_9 = arith.constant 0 : i32
    %11 = arith.cmpi ne, %10, %c0_i32_9 : i32
    scf.if %11 {
      %c0_10 = arith.constant 0 : index
      %c0_11 = arith.constant 0 : index
      %12 = vector.load %arg7[%c0_10, %c0_11] : memref<32x128xf32, #tpu.memory_space<vmem>>, vector<32x128xf32>
      %c0_12 = arith.constant 0 : index
      %c0_13 = arith.constant 0 : index
      %13 = vector.load %arg5[%c0_12, %c0_13] : memref<1x128xf32, #tpu.memory_space<vmem>>, vector<1x128xf32>
      %14 = vector.broadcast %13 : vector<1x128xf32> to vector<32x128xf32>
      %15 = arith.addf %12, %14 : vector<32x128xf32>
      %16 = arith.truncf %15 : vector<32x128xf32> to vector<32x128xbf16>
      %c0_14 = arith.constant 0 : index
      %c0_15 = arith.constant 0 : index
      %17 = vector.load %arg6[%c0_14, %c0_15] : memref<32x128xbf16, #tpu.memory_space<vmem>>, vector<32x128xbf16>
      tpu.vector_store %arg6[%c0_14, %c0_15], %16 {strides = array<i32>} : memref<32x128xbf16, #tpu.memory_space<vmem>>, vector<32x128xbf16>,
    } else {
    }
    return
  }
  func.func @transform_0(%arg0: i32, %arg1: i32, %arg2: i32) -> (i32, i32) {
    %c0_i32 = arith.constant 0 : i32
    return %arg0, %arg2 : i32, i32
  }
  func.func @transform_1(%arg0: i32, %arg1: i32, %arg2: i32) -> (i32, i32) {
    %c0_i32 = arith.constant 0 : i32
    return %arg2, %arg1 : i32, i32
  }
  func.func @transform_2(%arg0: i32, %arg1: i32, %arg2: i32) -> (i32, i32) {
    %c0_i32 = arith.constant 0 : i32
    %c0_i32_0 = arith.constant 0 : i32
    return %c0_i32, %arg1 : i32, i32
  }
  func.func @transform_3(%arg0: i32, %arg1: i32, %arg2: i32) -> (i32, i32) {
    %c0_i32 = arith.constant 0 : i32
    return %arg0, %arg1 : i32, i32
  }
}

</mosaic_0001>

<llo_original>
// kernel: tpu_custom_call.1
$region0: #{tpu_custom_call.1}
  #allocation0 [shape = 'u32[]', space=smem, size = 0x4, offset = 0x4, fixed_abs, tag = 'smem constant byte address 0x4 - core index']
  #allocation1 [shape = 'u32[144,128]{1,0:T(1,128)}', space=vmem, size = 0x12000, scoped, tag = 'internal scratch']
  #allocation2 [shape = 'f32[32,128]{1,0:T(8,128)}', space=vmem, size = 0x4000, scoped, tag = 'scratch operand']
  %s0 = inlined_call_operand.hbm [shape: bf16[32,128], index: 0, kind: input, shape index: {}]
  %s1 = inlined_call_operand.hbm [shape: bf16[128,128], index: 1, kind: input, shape index: {}]
  %s2 = inlined_call_operand.vmem [shape: f32[1,128], index: 2, kind: input, shape index: {}]
  %s3 = inlined_call_operand.hbm [shape: bf16[32,128], index: 3, kind: output, shape index: {}]
  %s4 = sld [smem:[#allocation0]]
  $region38: #{tpu_custom_call.1} parent=0
    _
  %s6 = ssub.s32 1, %s4
  %s7 = scalar_select 0, %s6, %s4
  $region1: #{tpu_custom_call.1} parent=0
    #allocation3 [shape = 'u8[8192]{0}', space=vmem, size = 0x2000, scoped, tag = 'input window, operand 0, single buffered']
    #allocation4 [shape = 's32[1]{0}', space=sflag, size = 0x4, scoped, tag = 'scoped memory for tpu_custom_call.1']
    #allocation5 [shape = 's32[1]{0}', space=sflag, size = 0x4, scoped, tag = 'scoped memory for tpu_custom_call.1']
    #allocation6 [shape = 'u8[32768]{0}', space=vmem, size = 0x8000, scoped, tag = 'input window, operand 1, single buffered']
    #allocation7 [shape = 's32[1]{0}', space=sflag, size = 0x4, scoped, tag = 'scoped memory for tpu_custom_call.1']
    #allocation8 [shape = 'u8[8192]{0}', space=vmem, size = 0x2000, scoped, tag = 'output window, operand 0, single buffered']
    %8 = vsyncpa [#allocation4], 0
    %9 = vsyncpa [#allocation7], 0
    %10 = vsyncpa [#allocation5], 0
    // Predicated region
    $region2: #{tpu_custom_call.1} parent=1 // pred_check
      _
    $region3: #{tpu_custom_call.1} parent=1 // pred_check_branch
      %12 = sbr.rel (0) target = $region5
    $region4: #{tpu_custom_call.1} parent=1 // pred_region
      %s14 = ssub.s32 256, 256
      %15 = vsyncadd [#allocation4], %s14
      %s16 = sshll.u32 [#allocation3], 4
      %s17 = int_to_ptr.vmem [resolvable:$true] %s16
      %22 = dma.hbm_to_vmem [thread:$0]  %s0, 256, %s17, [#allocation4], 64, 64, 4
    $region5: #{tpu_custom_call.1} parent=1 // pred_fallthru
      _
    // Predicated region
    $region6: #{tpu_custom_call.1} parent=1 // pred_check
      _
    $region7: #{tpu_custom_call.1} parent=1 // pred_check_branch
      %24 = sbr.rel (0) target = $region9
    $region8: #{tpu_custom_call.1} parent=1 // pred_region
      %s26 = ssub.s32 1024, 1024
      %27 = vsyncadd [#allocation7], %s26
      %s28 = sshll.u32 [#allocation6], 4
      %s29 = int_to_ptr.vmem [resolvable:$true] %s28
      %34 = dma.hbm_to_vmem [thread:$0]  %s1, 1024, %s29, [#allocation7], 64, 64, 4
    $region9: #{tpu_custom_call.1} parent=1 // pred_fallthru
      _
    // Predicated region
    $region10: #{tpu_custom_call.1} parent=1 // pred_check
      _
    $region11: #{tpu_custom_call.1} parent=1 // pred_check_branch
      %36 = sbr.rel (0) target = $region13
    $region12: #{tpu_custom_call.1} parent=1 // pred_region
      _
    $region13: #{tpu_custom_call.1} parent=1 // pred_fallthru
      _
    // Predicated region
    $region14: #{tpu_custom_call.1} parent=1 // pred_check
      _
    $region15: #{tpu_custom_call.1} parent=1 // pred_check_branch
      %38 = sbr.rel (0) target = $region17
    $region16: #{tpu_custom_call.1} parent=1 // pred_region
      %39 = dma.done [#allocation4], 256
    $region17: #{tpu_custom_call.1} parent=1 // pred_fallthru
      _
    // Predicated region
    $region18: #{tpu_custom_call.1} parent=1 // pred_check
      _
    $region19: #{tpu_custom_call.1} parent=1 // pred_check_branch
      %41 = sbr.rel (0) target = $region21
    $region20: #{tpu_custom_call.1} parent=1 // pred_region
      %42 = dma.done [#allocation7], 1024
    $region21: #{tpu_custom_call.1} parent=1 // pred_fallthru
      _
    %p44 = scmp.eq.s32.totalorder 0, 0
    // Predicated region
    $region22: #{tpu_custom_call.1} parent=1 // pred_check
      %p45 = pneg %p44
    $region23: #{tpu_custom_call.1} parent=1 // pred_check_branch
      %47 = sbr.rel (%p45) target = $region25
    $region24: #{tpu_custom_call.1} parent=1 // pred_region
      %48 = vst [vmem:[#allocation2] sm:$0xff] 0.0
      %49 = vst [vmem:[#allocation2 + $0x8] sm:$0xff] 0.0
      %50 = vst [vmem:[#allocation2 + $0x10] sm:$0xff] 0.0
      %51 = vst [vmem:[#allocation2 + $0x18] sm:$0xff] 0.0
    $region25: #{tpu_custom_call.1} parent=1 // pred_fallthru
      _
    %v52 = vld [vmem:[#allocation2] sm:$0xff]
    %v53 = vld [vmem:[#allocation2 + $0x8] sm:$0xff]
    %v54 = vld [vmem:[#allocation2 + $0x10] sm:$0xff]
    %v55 = vld [vmem:[#allocation2 + $0x18] sm:$0xff]
    %v56 = vld [vmem:[#allocation3] sm:$0xf]
    %v57 = vld [vmem:[#allocation3 + $0x4] sm:$0xf]
    %v58 = vld [vmem:[#allocation3 + $0x8] sm:$0xf]
    %v59 = vld [vmem:[#allocation3 + $0xc] sm:$0xf]
    %v60 = vld [vmem:[#allocation6] sm:$0xf]
    %v61 = vld [vmem:[#allocation6 + $0x4] sm:$0xf]
    %v62 = vld [vmem:[#allocation6 + $0x8] sm:$0xf]
    %v63 = vld [vmem:[#allocation6 + $0xc] sm:$0xf]
    %v64 = vld [vmem:[#allocation6 + $0x10] sm:$0xf]
    %v65 = vld [vmem:[#allocation6 + $0x14] sm:$0xf]
    %v66 = vld [vmem:[#allocation6 + $0x18] sm:$0xf]
    %v67 = vld [vmem:[#allocation6 + $0x1c] sm:$0xf]
    %v68 = vld [vmem:[#allocation6 + $0x20] sm:$0xf]
    %v69 = vld [vmem:[#allocation6 + $0x24] sm:$0xf]
    %v70 = vld [vmem:[#allocation6 + $0x28] sm:$0xf]
    %v71 = vld [vmem:[#allocation6 + $0x2c] sm:$0xf]
    %v72 = vld [vmem:[#allocation6 + $0x30] sm:$0xf]
    %v73 = vld [vmem:[#allocation6 + $0x34] sm:$0xf]
    %v74 = vld [vmem:[#allocation6 + $0x38] sm:$0xf]
    %v75 = vld [vmem:[#allocation6 + $0x3c] sm:$0xf]
    %v80 = vunpack.c.l.b16 %v56
    %v81 = vunpack.c.l.b16 %v57
    %v82 = vunpack.c.l.b16 %v58
    %v83 = vunpack.c.l.b16 %v59
    %v84 = vpack.c.b16 %v81, %v80
    %v85 = vpack.c.b16 %v83, %v82
    %v104 = vunpack.c.l.b16 %v60
    %v105 = vunpack.c.l.b16 %v61
    %v106 = vunpack.c.l.b16 %v62
    %v107 = vunpack.c.l.b16 %v63
    %v108 = vunpack.c.l.b16 %v64
    %v109 = vunpack.c.l.b16 %v65
    %v110 = vunpack.c.l.b16 %v66
    %v111 = vunpack.c.l.b16 %v67
    %v112 = vunpack.c.l.b16 %v68
    %v113 = vunpack.c.l.b16 %v69
    %v114 = vunpack.c.l.b16 %v70
    %v115 = vunpack.c.l.b16 %v71
    %v116 = vunpack.c.l.b16 %v72
    %v117 = vunpack.c.l.b16 %v73
    %v118 = vunpack.c.l.b16 %v74
    %v119 = vunpack.c.l.b16 %v75
    %v120 = vpack.c.b16 %v105, %v104
    %v121 = vpack.c.b16 %v107, %v106
    %v122 = vpack.c.b16 %v109, %v108
    %v123 = vpack.c.b16 %v111, %v110
    %v124 = vpack.c.b16 %v113, %v112
    %v125 = vpack.c.b16 %v115, %v114
    %v126 = vpack.c.b16 %v117, %v116
    %v127 = vpack.c.b16 %v119, %v118
    %136 = vmatprep.subr.bf16.mxu0 0
    %137 = vmatpush1.bf16.msra.mxu0 %v120
    %138 = vmatprep.subr.bf16.mxu0 0
    %139 = vmatpush1.bf16.msra.mxu0 %v121
    %140 = vmatprep.subr.bf16.mxu0 0
    %141 = vmatpush1.bf16.msra.mxu0 %v122
    %142 = vmatprep.subr.bf16.mxu0 0
    %143 = vmatpush1.bf16.msra.mxu0 %v123
    %144 = vmatprep.subr.bf16.mxu0 0
    %145 = vmatpush1.bf16.msra.mxu0 %v124
    %146 = vmatprep.subr.bf16.mxu0 0
    %147 = vmatpush1.bf16.msra.mxu0 %v125
    %148 = vmatprep.subr.bf16.mxu0 0
    %149 = vmatpush1.bf16.msra.mxu0 %v126
    %150 = vmatprep.subr.bf16.mxu0 0
    %151 = vmatpush1.bf16.msra.mxu0 %v127
    %152 = vmatprep.subr.bf16.mxu0 0
    %153 = vmatpush1.bf16.msra.mxu0 0
    %154 = vmatprep.subr.bf16.mxu0 0
    %155 = vmatpush1.bf16.msra.mxu0 0
    %156 = vmatprep.subr.bf16.mxu0 0
    %157 = vmatpush1.bf16.msra.mxu0 0
    %158 = vmatprep.subr.bf16.mxu0 0
    %159 = vmatpush1.bf16.msra.mxu0 0
    %160 = vmatprep.subr.bf16.mxu0 0
    %161 = vmatpush1.bf16.msra.mxu0 0
    %162 = vmatprep.subr.bf16.mxu0 0
    %163 = vmatpush1.bf16.msra.mxu0 0
    %164 = vmatprep.subr.bf16.mxu0 0
    %165 = vmatpush1.bf16.msra.mxu0 0
    %166 = vmatprep.subr.bf16.mxu0 0
    %167 = vmatpush1.bf16.msra.mxu0 0
    %168 = vmatprep.mubr.bf16.mxu0 0
    %169 = vmatmul.mubr.bf16.gmra.mrb[0].mxu0 %v84
    %v170 = vpop.f32.mrb[0].mxu0
    %v171 = vadd.f32 0.0, %v170
    %v172 = vpop.f32.mrb[0].mxu0
    %v173 = vpop.f32.mrb[0].mxu0
    %v174 = vadd.f32 0.0, %v173
    %v175 = vpop.f32.mrb[0].mxu0
    %176 = vmatprep.mubr.bf16.mxu0 0
    %177 = vmatmul.mubr.bf16.gmra.mrb[0].mxu0 %v85
    %v178 = vpop.f32.mrb[0].mxu0
    %v179 = vadd.f32 0.0, %v178
    %v180 = vpop.f32.mrb[0].mxu0
    %v181 = vpop.f32.mrb[0].mxu0
    %v182 = vadd.f32 0.0, %v181
    %v183 = vpop.f32.mrb[0].mxu0
    %184 = vdwg.mxu0
    %v185 = vadd.f32 %v52, %v171
    %v186 = vadd.f32 %v53, %v174
    %v187 = vadd.f32 %v54, %v179
    %v188 = vadd.f32 %v55, %v182
    %189 = vst [vmem:[#allocation2] sm:$0xff] %v185
    %190 = vst [vmem:[#allocation2 + $0x8] sm:$0xff] %v186
    %191 = vst [vmem:[#allocation2 + $0x10] sm:$0xff] %v187
    %192 = vst [vmem:[#allocation2 + $0x18] sm:$0xff] %v188
    // Predicated region
    $region26: #{tpu_custom_call.1} parent=1 // pred_check
      %p193 = pneg %p44
    $region27: #{tpu_custom_call.1} parent=1 // pred_check_branch
      %195 = sbr.rel (%p193) target = $region29
    $region28: #{tpu_custom_call.1} parent=1 // pred_region
      %v196 = vld [vmem:[#allocation2] sm:$0xff]
      %v197 = vld [vmem:[#allocation2 + $0x8] sm:$0xff]
      %v198 = vld [vmem:[#allocation2 + $0x10] sm:$0xff]
      %v199 = vld [vmem:[#allocation2 + $0x18] sm:$0xff]
      %v200 = vld [vmem:[%s2] sm:$0x1]
      %v202 = vlaneseq
      %v203 = vshrl.u32 %v202, 7
      %v204 = vsub.s32 0, %v203
      %v205 = vrot.slane %v200, %v204
      %v207 = vadd.f32 %v196, %v205
      %v208 = vadd.f32 %v197, %v205
      %v209 = vadd.f32 %v198, %v205
      %v210 = vadd.f32 %v199, %v205
      %v211 = vpack.c.bf16 %v208, %v207
      %v212 = vpack.c.bf16 %v210, %v209
      %v215 = vunpack.c.l.b16 %v211
      %v216 = vunpack.c.h.b16 %v211
      %v217 = vunpack.c.l.b16 %v212
      %v218 = vunpack.c.h.b16 %v212
      %v219 = vpack.c.b16 %v215, %v215
      %v220 = vpack.c.b16 %v216, %v216
      %v221 = vpack.c.b16 %v217, %v217
      %v222 = vpack.c.b16 %v218, %v218
      %227 = vst [vmem:[#allocation8] sm:$0xf] %v219
      %228 = vst [vmem:[#allocation8 + $0x4] sm:$0xf] %v220
      %229 = vst [vmem:[#allocation8 + $0x8] sm:$0xf] %v221
      %230 = vst [vmem:[#allocation8 + $0xc] sm:$0xf] %v222
    $region29: #{tpu_custom_call.1} parent=1 // pred_fallthru
      _
    // Predicated region
    $region30: #{tpu_custom_call.1} parent=1 // pred_check
      _
    $region31: #{tpu_custom_call.1} parent=1 // pred_check_branch
      %232 = sbr.rel (0) target = $region33
    $region32: #{tpu_custom_call.1} parent=1 // pred_region
      %s234 = ssub.s32 256, 256
      %235 = vsyncadd [#allocation5], %s234
      %s236 = sshll.u32 [#allocation8], 4
      %s237 = int_to_ptr.vmem [resolvable:$true] %s236
      %242 = dma.vmem_to_hbm [thread:$0]  %s237, 256, %s3, [#allocation5], 64, 64, 4
    $region33: #{tpu_custom_call.1} parent=1 // pred_fallthru
      _
    // Predicated region
    $region34: #{tpu_custom_call.1} parent=1 // pred_check
      _
    $region35: #{tpu_custom_call.1} parent=1 // pred_check_branch
      %244 = sbr.rel (0) target = $region37
    $region36: #{tpu_custom_call.1} parent=1 // pred_region
      %245 = dma.done [#allocation5], 256
    $region37: #{tpu_custom_call.1} parent=1 // pred_fallthru
      _
    %246 = vsyncpa [#allocation4], 1
    %247 = vsyncpa [#allocation7], 1
    %248 = vsyncpa [#allocation5], 1

</llo_original>
